<compile_context>
chip_gen: v5e
topology: v5e:2x2
jax: 0.10.0
libtpu: 0.0.40
codegen_flags: <defaults>
</compile_context>

<pallas_src>
import jax
import jax.numpy as jnp
from jax.experimental import pallas as pl
from jax.experimental.pallas import tpu as pltpu

N = 128                      # number of sampled points (lane axis inside the kernel)
D_IN, H, D_OUT = 2, 32, 1    # module: 2 -> 32 -> 32 -> 1
P_COLS = H + 6               # packed parameter slab width: [w2^T | w1^T | b1^T | b2^T | w3 | b3]


def condition_kernel(x_ref, p_ref, loss_ref):
    # x_ref: (3, N)      rows = x0, x1, precomputed f(x)   (lane-dense points)
    # p_ref: (H, P_COLS) packed parameters, kernel layout (see pack_for_kernel)
    # loss_ref: (1, 1)   scalar loss in SMEM
    x0 = x_ref[0:1, :]                                   # (1, N)
    x1 = x_ref[1:2, :]                                   # (1, N)
    rhs = x_ref[2:3, :]                                  # (1, N)  precomputed data function

    w2t = p_ref[:, 0:H]                                  # (H, H)  lane-aligned MXU operand
    w1a = p_ref[:, H:H + 1]                              # (H, 1)
    w1b = p_ref[:, H + 1:H + 2]                          # (H, 1)
    b1 = p_ref[:, H + 2:H + 3]                           # (H, 1)
    b2 = p_ref[:, H + 3:H + 4]                           # (H, 1)
    w3 = p_ref[:, H + 4:H + 5]                           # (H, 1)
    b3 = p_ref[0:1, H + 5:H + 6]                         # (1, 1)

    # layer 1 (K = D_IN = 2): two broadcast FMAs on the VPU -- no MXU round trip.
    h1 = jnp.tanh(w1a * x0 + w1b * x1 + b1)              # (H, N)

    # layer 2: the only matmul worth the MXU, (H x H) @ (H x N) with f32 accumulation.
    h2 = jnp.tanh(
        jnp.dot(w2t, h1, preferred_element_type=jnp.float32) + b2)      # (H, N)

    # layer 3 (H -> 1): elementwise multiply + sublane reduce, folded into the error path.
    y = jnp.sum(w3 * h2, axis=0, keepdims=True) + b3     # (1, N)

    # residual_fn: y - f(x); error_fn: squared error (D_OUT == 1); reduce_fn: mean.
    res = y - rhs
    loss_ref[0, 0] = jnp.sum(res * res) * jnp.float32(1.0 / N)


def pack_for_kernel(x, params):
    """ONE-TIME setup (mirrors torchphysics' static-sampler data-function precompute and
    _move_static_data): builds the two kernel-layout slabs so the per-call forward does
    no transposes and issues exactly two input DMAs."""
    w1, b1, w2, b2, w3, b3 = params
    # static data function f(x) = sin(pi x0) * sin(pi x1), evaluated once at the fixed points
    rhs = jnp.sin(jnp.pi * x[:, 0]) * jnp.sin(jnp.pi * x[:, 1])          # (N,)
    x_slab = jnp.stack([x[:, 0], x[:, 1], rhs], axis=0).astype(jnp.float32)   # (3, N)
    p_slab = jnp.concatenate(
        [w2.T,                              # cols 0:H        (H, H)  transposed once, here
         w1.T,                              # cols H:H+2      (H, 2)
         b1.T,                              # col  H+2        (H, 1)
         b2.T,                              # col  H+3        (H, 1)
         w3,                                # col  H+4        (H, 1)
         jnp.broadcast_to(b3, (H, 1))],     # col  H+5        b3 replicated; kernel reads row 0
        axis=1).astype(jnp.float32)                                      # (H, P_COLS)
    return x_slab, p_slab


def single_module_condition_forward(x_slab, p_slab):
    """reduce_fn(error_fn(residual_fn(module(x), f(x)))) as a scalar.

    Takes the pre-packed kernel-layout slabs (built once by pack_for_kernel); the per-call
    path is a single pallas_call with two dense input DMAs and an SMEM scalar output.
    """
    vmem = pl.BlockSpec(memory_space=pltpu.MemorySpace.VMEM)
    smem = pl.BlockSpec(memory_space=pltpu.MemorySpace.SMEM)
    loss = pl.pallas_call(
        condition_kernel,
        out_shape=jax.ShapeDtypeStruct((1, 1), jnp.float32),
        in_specs=[vmem, vmem],
        out_specs=smem,
        cost_estimate=pl.CostEstimate(
            flops=2 * H * H * N + 2 * D_IN * H * N + 2 * H * N + 4 * N,
            transcendentals=2 * H * N,                      # two tanh layers
            bytes_accessed=4 * (3 * N + H * P_COLS + 1),
        ),
    )(x_slab, p_slab)
    return loss[0, 0]


def reference_forward(x, params):
    w1, b1, w2, b2, w3, b3 = params
    rhs = jnp.sin(jnp.pi * x[:, 0:1]) * jnp.sin(jnp.pi * x[:, 1:2])
    h1 = jnp.tanh(x @ w1 + b1)
    h2 = jnp.tanh(h1 @ w2 + b2)
    y = h2 @ w3 + b3
    res = y - rhs
    err = jnp.sum(res * res, axis=1)
    return jnp.mean(err)


if __name__ == "__main__":
    key = jax.random.PRNGKey(0)
    k_x, k_w1, k_b1, k_w2, k_b2, k_w3, k_b3 = jax.random.split(key, 7)

    # sampler: N static points in the unit square (torchphysics layout [N, D_IN])
    x = jax.random.uniform(k_x, (N, D_IN), dtype=jnp.float32)

    # deterministic module parameters (synthetic init, no checkpoint);
    # standard torch-style layout: w is [in_dim, out_dim], b is [1, out_dim]
    s1 = 1.0 / jnp.sqrt(D_IN)
    s2 = 1.0 / jnp.sqrt(H)
    params = (
        jax.random.uniform(k_w1, (D_IN, H), jnp.float32, -s1, s1),
        jax.random.uniform(k_b1, (1, H), jnp.float32, -s1, s1),
        jax.random.uniform(k_w2, (H, H), jnp.float32, -s2, s2),
        jax.random.uniform(k_b2, (1, H), jnp.float32, -s2, s2),
        jax.random.uniform(k_w3, (H, D_OUT), jnp.float32, -s2, s2),
        jax.random.uniform(k_b3, (1, D_OUT), jnp.float32, -s2, s2),
    )

    # one-time setup (condition construction), then the lean per-call forward
    x_slab, p_slab = pack_for_kernel(x, params)
    x_slab, p_slab = jax.block_until_ready((x_slab, p_slab))

    loss = single_module_condition_forward(x_slab, p_slab)
    loss = jax.block_until_ready(loss)

    ref = reference_forward(x, params)
    assert jnp.allclose(loss, ref, rtol=1e-4, atol=1e-6), (loss, ref)

    print("KERNEL_OK")
</pallas_src>

<mosaic_0001>
module attributes {stable_mosaic.version = 11 : i64} {
  func.func @condition_kernel(%arg0: memref<3x128xf32, #tpu.memory_space<vmem>>, %arg1: memref<32x38xf32, #tpu.memory_space<vmem>>, %arg2: memref<1x1xf32, #tpu.memory_space<smem>>) attributes {dimension_semantics = [], scalar_prefetch = 0 : i64, scratch_operands = 0 : i64, tpu.core_type = #tpu.core_type<tc>} {
    %c0 = arith.constant 0 : index
    %c0_0 = arith.constant 0 : index
    %0 = vector.load %arg0[%c0, %c0_0] : memref<3x128xf32, #tpu.memory_space<vmem>>, vector<1x128xf32>
    %c1 = arith.constant 1 : index
    %c0_1 = arith.constant 0 : index
    %1 = vector.load %arg0[%c1, %c0_1] : memref<3x128xf32, #tpu.memory_space<vmem>>, vector<1x128xf32>
    %c2 = arith.constant 2 : index
    %c0_2 = arith.constant 0 : index
    %2 = vector.load %arg0[%c2, %c0_2] : memref<3x128xf32, #tpu.memory_space<vmem>>, vector<1x128xf32>
    %c0_3 = arith.constant 0 : index
    %c0_4 = arith.constant 0 : index
    %3 = vector.load %arg1[%c0_3, %c0_4] : memref<32x38xf32, #tpu.memory_space<vmem>>, vector<32x32xf32>
    %c0_5 = arith.constant 0 : index
    %c32 = arith.constant 32 : index
    %4 = vector.load %arg1[%c0_5, %c32] : memref<32x38xf32, #tpu.memory_space<vmem>>, vector<32x1xf32>
    %c0_6 = arith.constant 0 : index
    %c33 = arith.constant 33 : index
    %5 = vector.load %arg1[%c0_6, %c33] : memref<32x38xf32, #tpu.memory_space<vmem>>, vector<32x1xf32>
    %c0_7 = arith.constant 0 : index
    %c34 = arith.constant 34 : index
    %6 = vector.load %arg1[%c0_7, %c34] : memref<32x38xf32, #tpu.memory_space<vmem>>, vector<32x1xf32>
    %c0_8 = arith.constant 0 : index
    %c35 = arith.constant 35 : index
    %7 = vector.load %arg1[%c0_8, %c35] : memref<32x38xf32, #tpu.memory_space<vmem>>, vector<32x1xf32>
    %c0_9 = arith.constant 0 : index
    %c36 = arith.constant 36 : index
    %8 = vector.load %arg1[%c0_9, %c36] : memref<32x38xf32, #tpu.memory_space<vmem>>, vector<32x1xf32>
    %c0_10 = arith.constant 0 : index
    %c37 = arith.constant 37 : index
    %9 = vector.load %arg1[%c0_10, %c37] : memref<32x38xf32, #tpu.memory_space<vmem>>, vector<1x1xf32>
    %10 = vector.broadcast %4 : vector<32x1xf32> to vector<32x128xf32>
    %11 = vector.broadcast %0 : vector<1x128xf32> to vector<32x128xf32>
    %12 = arith.mulf %10, %11 : vector<32x128xf32>
    %13 = vector.broadcast %5 : vector<32x1xf32> to vector<32x128xf32>
    %14 = vector.broadcast %1 : vector<1x128xf32> to vector<32x128xf32>
    %15 = arith.mulf %13, %14 : vector<32x128xf32>
    %16 = arith.addf %12, %15 : vector<32x128xf32>
    %17 = vector.broadcast %6 : vector<32x1xf32> to vector<32x128xf32>
    %18 = arith.addf %16, %17 : vector<32x128xf32>
    %19 = math.tanh %18 : vector<32x128xf32>
    %cst = arith.constant dense<0.000000e+00> : vector<32x128xf32>
    %20 = tpu.matmul %3, %19, %cst {dimension_numbers = #tpu.dot_dimension_numbers<[1], [0], [0], [1], [0, 0, 1, 1], [], []>} : vector<32x32xf32>, vector<32x128xf32>, vector<32x128xf32> -> vector<32x128xf32>
    %21 = vector.broadcast %7 : vector<32x1xf32> to vector<32x128xf32>
    %22 = arith.addf %20, %21 : vector<32x128xf32>
    %23 = math.tanh %22 : vector<32x128xf32>
    %24 = vector.broadcast %8 : vector<32x1xf32> to vector<32x128xf32>
    %25 = arith.mulf %24, %23 : vector<32x128xf32>
    %cst_11 = arith.constant dense<0.000000e+00> : vector<128xf32>
    %26 = vector.multi_reduction <add>, %25, %cst_11 [0] : vector<32x128xf32> to vector<128xf32>
    %27 = vector.shape_cast %26 : vector<128xf32> to vector<1x128xf32>
    %28 = vector.broadcast %9 : vector<1x1xf32> to vector<1x128xf32>
    %29 = arith.addf %27, %28 : vector<1x128xf32>
    %30 = arith.subf %29, %2 : vector<1x128xf32>
    %31 = arith.mulf %30, %30 : vector<1x128xf32>
    %32 = vector.shape_cast %31 : vector<1x128xf32> to vector<1x1x128xf32>
    %cst_12 = arith.constant dense<0.000000e+00> : vector<1xf32>
    %33 = vector.multi_reduction <add>, %32, %cst_12 [1, 2] : vector<1x1x128xf32> to vector<1xf32>
    %34 = vector.shape_cast %33 : vector<1xf32> to vector<1x1x1xf32>
    %35 = vector.extract %34[0, 0, 0] : f32 from vector<1x1x1xf32>
    %cst_13 = arith.constant 7.812500e-03 : f32
    %36 = arith.mulf %35, %cst_13 : f32
    %c0_14 = arith.constant 0 : index
    %c0_15 = arith.constant 0 : index
    %37 = memref.load %arg2[%c0_14, %c0_15] : memref<1x1xf32, #tpu.memory_space<smem>>
    memref.store %36, %arg2[%c0_14, %c0_15] : memref<1x1xf32, #tpu.memory_space<smem>>
    return
  }
}

</mosaic_0001>

<llo_original>
// kernel: tpu_custom_call.1
$region0: #{tpu_custom_call.1}
  #allocation0 [shape = 'u32[]', space=smem, size = 0x4, offset = 0x4, fixed_abs, tag = 'smem constant byte address 0x4 - core index']
  #allocation1 [shape = 'u32[72,128]{1,0:T(1,128)}', space=vmem, size = 0x9000, scoped, tag = 'internal scratch']
  %s0 = inlined_call_operand.hbm [shape: f32[3,128], index: 0, kind: input, shape index: {}]
  %s1 = inlined_call_operand.hbm [shape: f32[32,38], index: 1, kind: input, shape index: {}]
  %s2 = inlined_call_operand.hbm [shape: f32[1,1], index: 2, kind: output, shape index: {}]
  %s3 = sld [smem:[#allocation0]]
  $region26: #{tpu_custom_call.1} parent=0
    _
  %s5 = ssub.s32 1, %s3
  %s6 = scalar_select 0, %s5, %s3
  $region1: #{tpu_custom_call.1} parent=0
    #allocation2 [shape = 'u8[2048]{0}', space=vmem, size = 0x800, scoped, tag = 'input window, operand 0, single buffered']
    #allocation3 [shape = 's32[1]{0}', space=sflag, size = 0x4, scoped, tag = 'scoped memory for tpu_custom_call.1']
    #allocation4 [shape = 's32[1]{0}', space=sflag, size = 0x4, scoped, tag = 'scoped memory for tpu_custom_call.1']
    #allocation5 [shape = 'u8[16384]{0}', space=vmem, size = 0x4000, scoped, tag = 'input window, operand 1, single buffered']
    #allocation6 [shape = 's32[1]{0}', space=sflag, size = 0x4, scoped, tag = 'scoped memory for tpu_custom_call.1']
    #allocation7 [shape = 'u8[512]{0}', space=smem, size = 0x200, scoped, tag = 'output window, operand 0, single buffered']
    %7 = vsyncpa [#allocation3], 0
    %8 = vsyncpa [#allocation6], 0
    %9 = vsyncpa [#allocation4], 0
    // Predicated region
    $region2: #{tpu_custom_call.1} parent=1 // pred_check
      _
    $region3: #{tpu_custom_call.1} parent=1 // pred_check_branch
      %11 = sbr.rel (0) target = $region5
    $region4: #{tpu_custom_call.1} parent=1 // pred_region
      %13 = vsyncadd [#allocation3], 0
      %s15 = sshll.u32 %s0, 4
      %s16 = int_to_ptr.hbm [resolvable:$true] %s15
      %s17 = sshll.u32 [#allocation2], 4
      %s18 = int_to_ptr.vmem [resolvable:$true] %s17
      %20 = dma.hbm_to_vmem [thread:$0]  %s16, 64, %s18, [#allocation3]
    $region5: #{tpu_custom_call.1} parent=1 // pred_fallthru
      _
    // Predicated region
    $region6: #{tpu_custom_call.1} parent=1 // pred_check
      _
    $region7: #{tpu_custom_call.1} parent=1 // pred_check_branch
      %22 = sbr.rel (0) target = $region9
    $region8: #{tpu_custom_call.1} parent=1 // pred_region
      %24 = vsyncadd [#allocation6], 0
      %s25 = sshll.u32 %s1, 4
      %s26 = int_to_ptr.hbm [resolvable:$true] %s25
      %s27 = sshll.u32 [#allocation5], 4
      %s28 = int_to_ptr.vmem [resolvable:$true] %s27
      %33 = dma.hbm_to_vmem [thread:$0]  %s26, 512, %s28, [#allocation6], 128, 128, 8
    $region9: #{tpu_custom_call.1} parent=1 // pred_fallthru
      _
    // Predicated region
    $region10: #{tpu_custom_call.1} parent=1 // pred_check
      _
    $region11: #{tpu_custom_call.1} parent=1 // pred_check_branch
      %35 = sbr.rel (0) target = $region13
    $region12: #{tpu_custom_call.1} parent=1 // pred_region
      %37 = dma.done [#allocation3], 64
    $region13: #{tpu_custom_call.1} parent=1 // pred_fallthru
      _
    // Predicated region
    $region14: #{tpu_custom_call.1} parent=1 // pred_check
      _
    $region15: #{tpu_custom_call.1} parent=1 // pred_check_branch
      %39 = sbr.rel (0) target = $region17
    $region16: #{tpu_custom_call.1} parent=1 // pred_region
      %41 = dma.done [#allocation6], 512
    $region17: #{tpu_custom_call.1} parent=1 // pred_fallthru
      _
    %v42 = vld [vmem:[#allocation2] sm:$0x1]
    %v43 = vld [vmem:[#allocation2 + $0x1] sm:$0x1]
    %v44 = vld [vmem:[#allocation2 + $0x2] sm:$0x1]
    %v45 = vld [vmem:[#allocation5] sm:$0xff]
    %v46 = vld [vmem:[#allocation5 + $0x8] sm:$0xff]
    %v47 = vld [vmem:[#allocation5 + $0x10] sm:$0xff]
    %v48 = vld [vmem:[#allocation5 + $0x18] sm:$0xff]
    %v49 = vld [vmem:[#allocation5] sm:$0x1]
    %51 = vset.pattern.permute.xlu0 32
    %52 = vperm.xlu0 %51, %v45
    %v53 = vpop.permute.xlu0 %52
    %56 = vset.pattern.permute.xlu0 32
    %57 = vperm.xlu0 %56, %v46
    %v58 = vpop.permute.xlu0 %57
    %61 = vset.pattern.permute.xlu0 32
    %62 = vperm.xlu0 %61, %v47
    %v63 = vpop.permute.xlu0 %62
    %66 = vset.pattern.permute.xlu0 32
    %67 = vperm.xlu0 %66, %v48
    %v68 = vpop.permute.xlu0 %67
    %v70 = vperm.slane %v42, 0
    %v71 = vmul.f32 %v53, %v70
    %v72 = vmul.f32 %v58, %v70
    %v73 = vmul.f32 %v63, %v70
    %v74 = vmul.f32 %v68, %v70
    %75 = vset.pattern.permute.xlu0 33
    %76 = vperm.xlu0 %75, %v45
    %v77 = vpop.permute.xlu0 %76
    %79 = vset.pattern.permute.xlu0 33
    %80 = vperm.xlu0 %79, %v46
    %v81 = vpop.permute.xlu0 %80
    %83 = vset.pattern.permute.xlu0 33
    %84 = vperm.xlu0 %83, %v47
    %v85 = vpop.permute.xlu0 %84
    %87 = vset.pattern.permute.xlu0 33
    %88 = vperm.xlu0 %87, %v48
    %v89 = vpop.permute.xlu0 %88
    %v91 = vperm.slane %v43, 0
    %v92 = vmul.f32 %v77, %v91
    %v93 = vmul.f32 %v81, %v91
    %v94 = vmul.f32 %v85, %v91
    %v95 = vmul.f32 %v89, %v91
    %v96 = vadd.f32 %v71, %v92
    %v97 = vadd.f32 %v72, %v93
    %v98 = vadd.f32 %v73, %v94
    %v99 = vadd.f32 %v74, %v95
    %100 = vset.pattern.permute.xlu0 34
    %101 = vperm.xlu0 %100, %v45
    %v102 = vpop.permute.xlu0 %101
    %104 = vset.pattern.permute.xlu0 34
    %105 = vperm.xlu0 %104, %v46
    %v106 = vpop.permute.xlu0 %105
    %108 = vset.pattern.permute.xlu0 34
    %109 = vperm.xlu0 %108, %v47
    %v110 = vpop.permute.xlu0 %109
    %112 = vset.pattern.permute.xlu0 34
    %113 = vperm.xlu0 %112, %v48
    %v114 = vpop.permute.xlu0 %113
    %v116 = vadd.f32 %v96, %v102
    %v117 = vadd.f32 %v97, %v106
    %v118 = vadd.f32 %v98, %v110
    %v119 = vadd.f32 %v99, %v114
    %v120 = vtanh.pop %v116
    %v121 = vtanh.pop %v117
    %v122 = vtanh.pop %v118
    %v123 = vtanh.pop %v119
    %124 = vset.pattern.permute.xlu0 35
    %125 = vperm.xlu0 %124, %v45
    %v126 = vpop.permute.xlu0 %125
    %128 = vset.pattern.permute.xlu0 35
    %129 = vperm.xlu0 %128, %v46
    %v130 = vpop.permute.xlu0 %129
    %132 = vset.pattern.permute.xlu0 35
    %133 = vperm.xlu0 %132, %v47
    %v134 = vpop.permute.xlu0 %133
    %136 = vset.pattern.permute.xlu0 35
    %137 = vperm.xlu0 %136, %v48
    %v138 = vpop.permute.xlu0 %137
    %vm140 = vcmask 261120
    %v141 = vsel %vm140, %v45, 0
    %v143 = vsel %vm140, %v46, 0
    %v145 = vsel %vm140, %v47, 0
    %v147 = vsel %vm140, %v48, 0
    %149 = vmatpush.msra.mxu0 0.0
    %150 = vmatpush.msra.mxu0 0.0
    %151 = vmatpush.msra.mxu0 0.0
    %152 = vmatpush.msra.mxu0 0.0
    %153 = vmatpush.msra.mxu0 0.0
    %154 = vmatpush.msra.mxu0 0.0
    %155 = vmatpush.msra.mxu0 0.0
    %156 = vmatpush.msra.mxu0 0.0
    %157 = vmatpush.msra.mxu0 0.0
    %158 = vmatpush.msra.mxu0 0.0
    %159 = vmatpush.msra.mxu0 0.0
    %160 = vmatpush.msra.mxu0 0.0
    %161 = vmatpush.msra.mxu0 %v123
    %162 = vmatpush.msra.mxu0 %v122
    %163 = vmatpush.msra.mxu0 %v121
    %164 = vmatpush.msra.mxu0 %v120
    %165 = vmatmul.f32.gmra.mxu0 %v141
    %v166 = vpop.f32.mrf.mxu0
    %v167 = vadd.f32 %v126, %v166
    %168 = vmatmul.f32.gmra.mxu0 %v143
    %v169 = vpop.f32.mrf.mxu0
    %v170 = vadd.f32 %v130, %v169
    %171 = vmatmul.f32.gmra.mxu0 %v145
    %v172 = vpop.f32.mrf.mxu0
    %v173 = vadd.f32 %v134, %v172
    %174 = vmatmul.f32.gmra.mxu0 %v147
    %v175 = vpop.f32.mrf.mxu0
    %v176 = vadd.f32 %v138, %v175
    %177 = vdwg.mxu0
    %v178 = vtanh.pop %v167
    %v179 = vtanh.pop %v170
    %v180 = vtanh.pop %v173
    %v181 = vtanh.pop %v176
    %182 = vset.pattern.permute.xlu0 36
    %183 = vperm.xlu0 %182, %v45
    %v184 = vpop.permute.xlu0 %183
    %186 = vset.pattern.permute.xlu0 36
    %187 = vperm.xlu0 %186, %v46
    %v188 = vpop.permute.xlu0 %187
    %190 = vset.pattern.permute.xlu0 36
    %191 = vperm.xlu0 %190, %v47
    %v192 = vpop.permute.xlu0 %191
    %194 = vset.pattern.permute.xlu0 36
    %195 = vperm.xlu0 %194, %v48
    %v196 = vpop.permute.xlu0 %195
    %v198 = vmul.f32 %v184, %v178
    %v199 = vmul.f32 %v188, %v179
    %v200 = vmul.f32 %v192, %v180
    %v201 = vmul.f32 %v196, %v181
    %v202 = vadd.f32 %v198, %v199
    %v203 = vadd.f32 %v202, %v200
    %v204 = vadd.f32 %v203, %v201
    %v205 = vrot.slane %v204, 4
    %v206 = vadd.f32 %v204, %v205
    %v207 = vrot.slane %v206, 2
    %v208 = vadd.f32 %v206, %v207
    %v209 = vrot.slane %v208, 1
    %v210 = vadd.f32 %v208, %v209
    %212 = vset.pattern.permute.xlu0 37
    %213 = vperm.xlu0 %212, %v49
    %v214 = vpop.permute.xlu0 %213
    %v216 = vadd.f32 %v210, %v214
    %v217 = vsub.f32 %v216, %v44
    %v218 = vmul.f32 %v217, %v217
    %vm219 = vcmask 1040384
    %v220 = vsel %vm219, %v218, 0.0
    %221 = vadd.xlane.f32.xlu0 %v220
    %v222 = vpop.xlane.xlu0 %221
    %v223 = vrot.slane %v222, 4
    %v224 = vadd.f32 %v222, %v223
    %v225 = vrot.slane %v224, 2
    %v226 = vadd.f32 %v224, %v225
    %v227 = vrot.slane %v226, 1
    %v228 = vadd.f32 %v226, %v227
    %s229 = vtos %v228
    %s230 = smul.f32 %s229, 0.0078125
    %s231 = scalar_lea.smem [#allocation7], 0
    %232 = sst [smem:[%s231]] %s230
    // Predicated region
    $region18: #{tpu_custom_call.1} parent=1 // pred_check
      _
    $region19: #{tpu_custom_call.1} parent=1 // pred_check_branch
      %234 = sbr.rel (0) target = $region21
    $region20: #{tpu_custom_call.1} parent=1 // pred_region
      %236 = vsyncadd [#allocation4], 0
      %s238 = sshll.u32 %s2, 4
      %s239 = int_to_ptr.hbm [resolvable:$true] %s238
      %241 = dma.smem_to_hbm [#allocation7], 16, %s239, [#allocation4]
    $region21: #{tpu_custom_call.1} parent=1 // pred_fallthru
      _
    // Predicated region
    $region22: #{tpu_custom_call.1} parent=1 // pred_check
      _
    $region23: #{tpu_custom_call.1} parent=1 // pred_check_branch
      %243 = sbr.rel (0) target = $region25
    $region24: #{tpu_custom_call.1} parent=1 // pred_region
      %245 = dma.done [#allocation4], 16
    $region25: #{tpu_custom_call.1} parent=1 // pred_fallthru
      _
    %246 = sfence
    %247 = vsyncpa [#allocation3], 1
    %248 = vsyncpa [#allocation6], 1
    %249 = vsyncpa [#allocation4], 1

</llo_original>
